<compile_context>
chip_gen: v7x
topology: tpu7x:2x2x1
jax: 0.10.0
libtpu: 0.0.40
codegen_flags: <defaults>
</compile_context>

<pallas_src>
import jax
import jax.numpy as jnp
from jax.experimental import pallas as pl
from jax.experimental.pallas import tpu as pltpu


def _pos_embed_kernel(x_ref, pos_ref, o_ref):
    # x_ref / o_ref: (tR, C) tiles (batch dim squeezed); pos_ref: (tR, C), same dtype.
    o_ref[...] = x_ref[...] + pos_ref[...]


def _default_tile_target_bytes():
    """Per-generation row-tile byte target (bigger tiles amortize ~0.35us/step)."""
    kind = ""
    try:
        kind = jax.devices()[0].device_kind.lower()
    except Exception:
        pass
    if "v7" in kind:
        return 5 * 1024 * 1024   # 3.2 TB/s HBM: fixed step overhead is ~20% at 2 MiB
    if "v6" in kind:
        return 4 * 1024 * 1024   # measured f32-add roofline fraction plateaus here
    return 2 * 1024 * 1024       # v5e (16 MiB default scoped VMEM) / unknown: conservative


def _pick_row_tile(rows, bytes_per_row, target_bytes, sub_mult):
    """Row tile: multiple of `sub_mult` sublane rows (or the full extent)."""
    if rows <= sub_mult:
        return rows
    t = (target_bytes // max(bytes_per_row, 1)) // sub_mult * sub_mult
    t = max(sub_mult, int(t))
    if t >= rows:
        return rows  # full extent always satisfies the (8,128) tiling rule
    return t


def position_embedding_forward(x, pos_embedding, *, target_block_bytes=None,
                               donate_x=False):
    """x: [B, T, D]; pos_embedding: [seq_length, D] with seq_length >= T."""
    B, T, D = x.shape
    S, Dp = pos_embedding.shape
    assert Dp == D, "hidden dim mismatch"
    assert T <= S, "sequence longer than the positional table"

    # One-time O(T*D) slice + cast; always slicing to [:T] also removes any
    # dependence on Pallas partial-block masking reading past S.
    # TODO(synk): output intentionally keeps x.dtype even if pos_embedding is a wider
    # dtype (differs from PyTorch type promotion when parameter/activation dtypes differ).
    pos = pos_embedding[:T, :].astype(x.dtype)

    if D % 128 == 0:
        # Already lane-dense.
        x3d, pos2d, rows, cols = x, pos, T, D
    elif (T * D) % 128 == 0:
        # Small / unaligned D: flatten the (T, D) plane to 128-wide lanes so
        # output stores are unmasked (lane-dense output is the biggest lever).
        cols = 128
        rows = (T * D) // 128
        x3d = x.reshape(B, rows, cols)
        pos2d = pos.reshape(rows, cols)
    else:
        # TODO(synk): prefer padding D to a multiple of 128 at parameter-creation /
        # model level; masked lane stores here waste (128 - D%128)/128 of bandwidth.
        x3d, pos2d, rows, cols = x, pos, T, D

    if target_block_bytes is None:
        target_block_bytes = _default_tile_target_bytes()

    itemsize = x.dtype.itemsize
    sub_mult = {4: 8, 2: 16, 1: 32}.get(itemsize, 8)  # packing-aware sublane rounding
    tR = _pick_row_tile(rows, cols * itemsize, target_block_bytes, sub_mult)

    # Megacore guard (v7x has 2 TensorCores): avoid a degenerate 1x1 grid at B == 1.
    if B == 1 and tR >= rows and rows > sub_mult:
        half = -(-rows // 2)
        cand = max(sub_mult, -(-half // sub_mult) * sub_mult)
        if cand < rows:
            tR = cand

    grid = (pl.cdiv(rows, tR), B)  # batch innermost: pos tile resident across b

    # Scoped VMEM: x(2 bufs) + out(2 bufs) + pos(<=2 bufs) tiles + headroom,
    # capped well below v7x's 64 MiB physical VMEM.
    tile_bytes = tR * cols * itemsize
    vmem_limit = int(min(max(6 * tile_bytes + 4 * 1024 * 1024, 16 * 1024 * 1024),
                         48 * 1024 * 1024))

    cost = pl.CostEstimate(
        flops=int(B * rows * cols),
        transcendentals=0,
        bytes_accessed=int(2 * B * rows * cols * itemsize + rows * cols * itemsize),
    )

    def run(pos_buffer_count):
        pos_kwargs = {}
        if pos_buffer_count is not None:
            pos_kwargs["pipeline_mode"] = pl.Buffered(pos_buffer_count)
        extra = {"input_output_aliases": {0: 0}} if donate_x else {}
        return pl.pallas_call(
            _pos_embed_kernel,
            out_shape=jax.ShapeDtypeStruct((B, rows, cols), x.dtype),
            grid_spec=pltpu.PrefetchScalarGridSpec(
                num_scalar_prefetch=0,
                grid=grid,
                in_specs=[
                    # One (tR, cols) slab of one batch element per grid step.
                    pl.BlockSpec((pl.Squeezed(), tR, cols), lambda t, b: (b, t, 0)),
                    # Positional tile: index depends only on t -> fetched once per row tile.
                    pl.BlockSpec((tR, cols), lambda t, b: (t, 0), **pos_kwargs),
                ],
                out_specs=pl.BlockSpec((pl.Squeezed(), tR, cols), lambda t, b: (b, t, 0)),
            ),
            compiler_params=pltpu.CompilerParams(
                dimension_semantics=("parallel", "parallel"),
                vmem_limit_bytes=vmem_limit,
            ),
            cost_estimate=cost,
            **extra,
        )(x3d, pos2d)

    # pos block index changes only once every B steps -> single-buffering it frees a
    # full tile of VMEM for bigger x/out tiles; keep double-buffering for tiny B
    # (one exposed pos DMA per row tile would then be a larger fraction of step time).
    if B >= 8:
        try:
            out = run(1)
        except Exception:
            out = run(None)  # pipeline_mode / Buffered(1) unsupported -> default buffers
    else:
        out = run(None)

    return out.reshape(B, T, D)


if __name__ == "__main__":
    key = jax.random.PRNGKey(0)
    k = jax.random.split(key, 6)

    # 1) Primary module-consistent shapes: lane-dense reshape path
    #    (D=32 not a multiple of 128, T*D=256 is).
    B, T, D, S = 2, 8, 32, 16
    x = jax.random.normal(k[0], (B, T, D), dtype=jnp.float32)
    # nn.Parameter init is zeros; use non-zero deterministic values so the add is exercised.
    pos = jax.random.normal(k[1], (S, D), dtype=jnp.float32) * 0.02
    out = jax.block_until_ready(position_embedding_forward(x, pos))
    ref = x + pos[:T, :][None, :, :]
    assert out.shape == (B, T, D)
    assert jnp.allclose(out, ref, atol=1e-6), "mismatch vs reference (lane-dense path)"

    # 2) Aligned-D path (D % 128 == 0).
    B2, T2, D2, S2 = 2, 16, 128, 32
    x2 = jax.random.normal(k[2], (B2, T2, D2), dtype=jnp.float32)
    pos2 = jax.random.normal(k[3], (S2, D2), dtype=jnp.float32) * 0.02
    out2 = jax.block_until_ready(position_embedding_forward(x2, pos2))
    ref2 = x2 + pos2[:T2, :][None, :, :]
    assert jnp.allclose(out2, ref2, atol=1e-6), "mismatch vs reference (direct path)"

    # 3) Regression: T not a multiple of the row tile, S barely >= T, B >= 8
    #    (exercises single-buffered pos + partial trailing blocks), bf16 x with an
    #    f32 table (exercises the wrapper pre-cast and 16-row sublane rounding).
    B3, T3, D3, S3 = 8, 20, 128, 20
    x3 = jax.random.normal(k[4], (B3, T3, D3), dtype=jnp.bfloat16)
    pos3 = jax.random.normal(k[5], (S3, D3), dtype=jnp.float32) * 0.02
    out3 = jax.block_until_ready(
        position_embedding_forward(x3, pos3, target_block_bytes=4096))
    ref3 = x3 + pos3[:T3, :].astype(jnp.bfloat16)[None, :, :]
    assert out3.dtype == jnp.bfloat16
    assert jnp.allclose(out3.astype(jnp.float32), ref3.astype(jnp.float32),
                        atol=2e-2), "mismatch vs reference (bf16 / partial-tile path)"

    print("KERNEL_OK")
</pallas_src>

<mosaic_0001>
module attributes {stable_mosaic.version = 11 : i64} {
  func.func @_pos_embed_kernel(%arg0: i32, %arg1: i32, %arg2: memref<1x2x128xf32, #tpu.memory_space<vmem>>, %arg3: memref<2x128xf32, #tpu.memory_space<vmem>>, %arg4: memref<1x2x128xf32, #tpu.memory_space<vmem>>) attributes {dimension_semantics = [#tpu.dimension_semantics<parallel>, #tpu.dimension_semantics<parallel>], iteration_bounds = array<i64: 1, 2>, scalar_prefetch = 0 : i64, scratch_operands = 0 : i64, tpu.core_type = #tpu.core_type<tc>, window_params = [{transform_indices = @transform_0, window_bounds = array<i64: 1, 2, 128>}, {transform_indices = @transform_1, window_bounds = array<i64: 2, 128>}, {transform_indices = @transform_2, window_bounds = array<i64: 1, 2, 128>}]} {
    %c0 = arith.constant 0 : index
    %c0_0 = arith.constant 0 : index
    %c0_1 = arith.constant 0 : index
    %0 = vector.load %arg2[%c0, %c0_0, %c0_1] : memref<1x2x128xf32, #tpu.memory_space<vmem>>, vector<1x2x128xf32>
    %1 = vector.shape_cast %0 : vector<1x2x128xf32> to vector<2x128xf32>
    %c0_2 = arith.constant 0 : index
    %c0_3 = arith.constant 0 : index
    %2 = vector.load %arg3[%c0_2, %c0_3] : memref<2x128xf32, #tpu.memory_space<vmem>>, vector<2x128xf32>
    %3 = arith.addf %1, %2 : vector<2x128xf32>
    %c0_4 = arith.constant 0 : index
    %c0_5 = arith.constant 0 : index
    %c0_6 = arith.constant 0 : index
    %4 = vector.load %arg4[%c0_4, %c0_5, %c0_6] : memref<1x2x128xf32, #tpu.memory_space<vmem>>, vector<1x2x128xf32>
    %5 = vector.shape_cast %4 : vector<1x2x128xf32> to vector<2x128xf32>
    %6 = vector.shape_cast %3 : vector<2x128xf32> to vector<1x2x128xf32>
    tpu.vector_store %arg4[%c0_4, %c0_5, %c0_6], %6 {strides = array<i32>} : memref<1x2x128xf32, #tpu.memory_space<vmem>>, vector<1x2x128xf32>,
    return
  }
  func.func @transform_0(%arg0: i32, %arg1: i32) -> (i32, i32, i32) {
    %c0_i32 = arith.constant 0 : i32
    %c0_i32_0 = arith.constant 0 : i32
    return %arg1, %arg0, %c0_i32 : i32, i32, i32
  }
  func.func @transform_1(%arg0: i32, %arg1: i32) -> (i32, i32) {
    %c0_i32 = arith.constant 0 : i32
    %c0_i32_0 = arith.constant 0 : i32
    return %arg0, %c0_i32 : i32, i32
  }
  func.func @transform_2(%arg0: i32, %arg1: i32) -> (i32, i32, i32) {
    %c0_i32 = arith.constant 0 : i32
    %c0_i32_0 = arith.constant 0 : i32
    return %arg1, %arg0, %c0_i32 : i32, i32, i32
  }
}

</mosaic_0001>

<llo_original>
// kernel: tpu_custom_call.1
$region0: #{tpu_custom_call.1}
  #allocation0 [shape = 'u32[]', space=smem, size = 0x4, offset = 0x4, fixed_abs, tag = 'smem constant byte address 0x4 - core index']
  #allocation1 [shape = 'u32[144,128]{1,0:T(1,128)}', space=vmem, size = 0x12000, scoped, tag = 'internal scratch']
  %s0 = inlined_call_operand.hbm [shape: f32[2,2,128], index: 0, kind: input, shape index: {}]
  %s1 = inlined_call_operand.vmem [shape: f32[2,128], index: 1, kind: input, shape index: {}]
  %s2 = inlined_call_operand.hbm [shape: f32[2,2,128], index: 2, kind: output, shape index: {}]
  %s3 = sld [smem:[#allocation0]]
  $region45: #{tpu_custom_call.1} parent=0
    _
  %s5 = ssub.s32 1, %s3
  %s6 = scalar_select 0, %s5, %s3
  $region1: #{tpu_custom_call.1} parent=0
    #allocation2 [shape = 'u8[2048]{0}', space=vmem, size = 0x800, scoped, tag = 'input window, operand 0']
    #allocation3 [shape = 's32[2]{0}', space=sflag, size = 0x8, scoped, tag = 'scoped memory for tpu_custom_call.1']
    #allocation4 [shape = 's32[2]{0}', space=sflag, size = 0x8, scoped, tag = 'scoped memory for tpu_custom_call.1']
    #allocation5 [shape = 'u8[2048]{0}', space=vmem, size = 0x800, scoped, tag = 'output window, operand 0']
    %7 = vsyncpa [#allocation3], 0
    %s8 = scalar_lea.sflag [#allocation3], 1
    %9 = vsyncpa %s8, 0
    %10 = vsyncpa [#allocation4], 0
    %s11 = scalar_lea.sflag [#allocation4], 1
    %12 = vsyncpa %s11, 0
    loop: start=0, step=1, limit=4
    $region2: #{tpu_custom_call.1} parent=1 // loop_pre_header
      _
    $region3: #{tpu_custom_call.1} parent=1 // loop_header
      %s14 = sphi 0, %s18
      %p15 = scmp.ge.s32.totalorder %s14, 4
      %s21 = sphi 0, %s33
      %s22 = sphi 0, %s29
      %s23 = sphi 0, %s21
      %s24 = sphi 0, %s22
      %s25 = sphi 0, %s23
      %s26 = sphi 0, %s24
      %s38 = sphi 0, %s40
      %s41 = sphi 0, %s38
      %s42 = sphi 0, %s41
      %s58 = sphi 0, %s42
      %s64 = sphi 0, %s66
      %s67 = sphi 0, %s64
      %s68 = sphi 0, %s67
      %s84 = sphi 0, %s68
      %s92 = sphi 0, %s94
      %s95 = sphi 0, %s92
      %s96 = sphi 0, %s95
      %s112 = sphi 0, %s96
    $region4: #{tpu_custom_call.1} parent=1 // loop_header_branch
      %17 = sbr.rel (%p15) target = $region8
    $region5: #{tpu_custom_call.1} parent=1 // loop_body
      %s19 = ssub.s32 %s14, 1
      %s20 = ssub.s32 %s14, 2
      %s27 = sadd.s32 1, %s22
      %p28 = scmp.ge.s32.totalorder %s27, 2
      %s29 = scalar_select %p28, 0, %s27
      %s30 = sadd.s32 1, %s21
      %s31 = scalar_select %p28, %s30, %s21
      %p32 = scmp.ge.s32.totalorder %s31, 1
      %s33 = scalar_select %p32, 0, %s31
      %s34 = ssub.s32 %s22, %s29
      %s35 = ssub.s32 %s21, %s33
      %s36 = sor.u32 %s34, %s35
      %p37 = scmp.eq.s32.totalorder %s36, 0
      %s39 = sadd.s32 %s38, 1
      %s40 = scalar_select %p37, %s38, %s39
      %p43 = pneg %p37
      %p44 = scmp.eq.s32.totalorder %s14, 1
      %p45 = por %p43, %p44
      %p46 = scmp.ne.s32.totalorder %s38, %s41
      %p47 = scmp.eq.s32.totalorder %s14, 0
      %p48 = por %p46, %p47
      %p49 = scmp.ne.s32.totalorder %s38, %s41
      %p50 = scmp.eq.s32.totalorder %s19, 1
      %p51 = por %p49, %p50
      %p52 = scmp.ne.s32.totalorder %s41, %s42
      %p53 = scmp.eq.s32.totalorder %s19, 0
      %p54 = por %p52, %p53
      %p55 = scmp.ne.s32.totalorder %s41, %s42
      %p56 = scmp.eq.s32.totalorder %s20, 1
      %p57 = por %p55, %p56
      %p59 = scmp.ne.s32.totalorder %s42, %s58
      %p60 = scmp.eq.s32.totalorder %s20, 0
      %p61 = por %p59, %p60
      %s62 = ssub.s32 %s21, %s33
      %p63 = scmp.eq.s32.totalorder %s62, 0
      %s65 = sadd.s32 %s64, 1
      %s66 = scalar_select %p63, %s64, %s65
      %p69 = pneg %p63
      %p70 = scmp.eq.s32.totalorder %s14, 1
      %p71 = por %p69, %p70
      %p72 = scmp.ne.s32.totalorder %s64, %s67
      %p73 = scmp.eq.s32.totalorder %s14, 0
      %p74 = por %p72, %p73
      %p75 = scmp.ne.s32.totalorder %s64, %s67
      %p76 = scmp.eq.s32.totalorder %s19, 1
      %p77 = por %p75, %p76
      %p78 = scmp.ne.s32.totalorder %s67, %s68
      %p79 = scmp.eq.s32.totalorder %s19, 0
      %p80 = por %p78, %p79
      %p81 = scmp.ne.s32.totalorder %s67, %s68
      %p82 = scmp.eq.s32.totalorder %s20, 1
      %p83 = por %p81, %p82
      %p85 = scmp.ne.s32.totalorder %s68, %s84
      %p86 = scmp.eq.s32.totalorder %s20, 0
      %p87 = por %p85, %p86
      %s88 = ssub.s32 %s22, %s29
      %s89 = ssub.s32 %s21, %s33
      %s90 = sor.u32 %s88, %s89
      %p91 = scmp.eq.s32.totalorder %s90, 0
      %s93 = sadd.s32 %s92, 1
      %s94 = scalar_select %p91, %s92, %s93
      %p97 = pneg %p91
      %p98 = scmp.eq.s32.totalorder %s14, 1
      %p99 = por %p97, %p98
      %p100 = scmp.ne.s32.totalorder %s92, %s95
      %p101 = scmp.eq.s32.totalorder %s14, 0
      %p102 = por %p100, %p101
      %p103 = scmp.ne.s32.totalorder %s92, %s95
      %p104 = scmp.eq.s32.totalorder %s19, 1
      %p105 = por %p103, %p104
      %p106 = scmp.ne.s32.totalorder %s95, %s96
      %p107 = scmp.eq.s32.totalorder %s19, 0
      %p108 = por %p106, %p107
      %p109 = scmp.ne.s32.totalorder %s95, %s96
      %p110 = scmp.eq.s32.totalorder %s20, 1
      %p111 = por %p109, %p110
      %p113 = scmp.ne.s32.totalorder %s96, %s112
      %p114 = scmp.eq.s32.totalorder %s20, 0
      %p115 = por %p113, %p114
      %p116 = scmp.le.s32.totalorder 1, %s14
      %p117 = scmp.lt.s32.totalorder %s14, 3
      %p118 = pnand %p116, %p117
      %p119 = pneg %p118
      // Predicated region
      $region9: #{tpu_custom_call.1} parent=5 // pred_check
        _
      $region10: #{tpu_custom_call.1} parent=5 // pred_check_branch
        %121 = sbr.rel (%p118) target = $region12
      $region11: #{tpu_custom_call.1} parent=5 // pred_region
        %s122 = ssub.s32 %s14, 1
        // Predicated region
        $region13: #{tpu_custom_call.1} parent=11 // pred_check
          %p123 = pneg %p80
        $region14: #{tpu_custom_call.1} parent=11 // pred_check_branch
          %125 = sbr.rel (%p123) target = $region16
        $region15: #{tpu_custom_call.1} parent=11 // pred_region
          %p126 = scmp.lt.s32.totalorder %s23, 0
          %s127 = scalar_select %p126, %s23, 0
          %s128 = smul.addr %s127, 2
          %s129 = scalar_lea.vmem %s1, %s128
        $region16: #{tpu_custom_call.1} parent=11 // pred_fallthru
          _
      $region12: #{tpu_custom_call.1} parent=5 // pred_fallthru
        _
      %p130 = scmp.lt.s32.totalorder %s14, 2
      // Predicated region
      $region17: #{tpu_custom_call.1} parent=5 // pred_check
        %p131 = pneg %p130
      $region18: #{tpu_custom_call.1} parent=5 // pred_check_branch
        %133 = sbr.rel (%p131) target = $region20
      $region19: #{tpu_custom_call.1} parent=5 // pred_region
        // Predicated region
        $region21: #{tpu_custom_call.1} parent=19 // pred_check
          %p134 = pneg %p48
        $region22: #{tpu_custom_call.1} parent=19 // pred_check_branch
          %136 = sbr.rel (%p134) target = $region24
        $region23: #{tpu_custom_call.1} parent=19 // pred_region
          %s137 = sand.u32 %s38, 1
          %s138 = scalar_lea.sflag [#allocation3], %s137
          %s139 = sand.u32 %s38, 1
          %s140 = smul.addr %s139, 2
          %s141 = scalar_lea.vmem [#allocation2], %s140
          %s143 = ssub.s32 32, 32
          %144 = vsyncadd %s138, %s143
          %s145 = sadd.s32 %s21, %s22
          %s146 = smul.addr %s145, 32
          %s147 = scalar_lea.hbm %s0, %s146
          %s149 = sshll.u32 %s141, 4
          %s150 = int_to_ptr.vmem [resolvable:$true] %s149
          %152 = dma.hbm_to_vmem [thread:$0]  %s147, 32, %s150, %s138
        $region24: #{tpu_custom_call.1} parent=19 // pred_fallthru
          _
      $region20: #{tpu_custom_call.1} parent=5 // pred_fallthru
        _
      %p153 = scmp.le.s32.totalorder 1, %s14
      %p154 = scmp.lt.s32.totalorder %s14, 3
      %p155 = pnand %p153, %p154
      %p156 = pneg %p155
      // Predicated region
      $region25: #{tpu_custom_call.1} parent=5 // pred_check
        _
      $region26: #{tpu_custom_call.1} parent=5 // pred_check_branch
        %158 = sbr.rel (%p155) target = $region28
      $region27: #{tpu_custom_call.1} parent=5 // pred_region
        %s159 = ssub.s32 %s14, 1
        %s160 = sand.u32 %s41, 1
        %s161 = scalar_lea.sflag [#allocation3], %s160
        %s162 = sand.u32 %s41, 1
        %s163 = smul.addr %s162, 2
        %s164 = scalar_lea.vmem [#allocation2], %s163
        // Predicated region
        $region29: #{tpu_custom_call.1} parent=27 // pred_check
          %p165 = pneg %p54
        $region30: #{tpu_custom_call.1} parent=27 // pred_check_branch
          %167 = sbr.rel (%p165) target = $region32
        $region31: #{tpu_custom_call.1} parent=27 // pred_region
          %168 = dma.done %s161, 32
        $region32: #{tpu_custom_call.1} parent=27 // pred_fallthru
          _
        %s169 = sand.u32 %s41, 1
        %s170 = scalar_lea.sflag [#allocation3], %s169
        %s171 = sand.u32 %s41, 1
        %s172 = smul.addr %s171, 2
        %s173 = scalar_lea.vmem [#allocation2], %s172
        %p174 = pneg %p54
        %p175 = pneg %p51
        %p176 = scmp.lt.s32.totalorder %s23, 0
        %s177 = scalar_select %p176, %s23, 0
        %s178 = smul.addr %s177, 2
        %s179 = scalar_lea.vmem %s1, %s178
        %p180 = pneg %p80
        %p181 = pneg %p77
        %p182 = pneg %p108
        %p183 = pneg %p105
        %s184 = sand.u32 %s95, 1
        %s185 = scalar_lea.sflag [#allocation4], %s184
        %s186 = sand.u32 %s95, 1
        %s187 = smul.addr %s186, 2
        %s188 = scalar_lea.vmem [#allocation5], %s187
        %p189 = scmp.lt.s32.totalorder %s23, 0
        %s190 = scalar_select %p189, %s23, 0
        %s191 = smul.addr %s190, 2
        %s192 = scalar_lea.vmem %s1, %s191
        %v193 = vld [vmem:[%s164] sm:$0x3]
        %v194 = vld [vmem:[%s192] sm:$0x3]
        %v195 = vadd.f32 %v193, %v194
        %196 = vst [vmem:[%s188] sm:$0x3] %v195
        %s197 = sand.u32 %s95, 1
        %s198 = scalar_lea.sflag [#allocation4], %s197
        %s199 = sand.u32 %s95, 1
        %s200 = smul.addr %s199, 2
        %s201 = scalar_lea.vmem [#allocation5], %s200
        // Predicated region
        $region33: #{tpu_custom_call.1} parent=27 // pred_check
          %p202 = pneg %p105
        $region34: #{tpu_custom_call.1} parent=27 // pred_check_branch
          %204 = sbr.rel (%p202) target = $region36
        $region35: #{tpu_custom_call.1} parent=27 // pred_region
          %s206 = ssub.s32 32, 32
          %207 = vsyncadd %s198, %s206
          %s208 = sadd.s32 %s23, %s24
          %s209 = smul.addr %s208, 32
          %s210 = scalar_lea.hbm %s2, %s209
          %s212 = sshll.u32 %s201, 4
          %s213 = int_to_ptr.vmem [resolvable:$true] %s212
          %215 = dma.vmem_to_hbm [thread:$0]  %s213, 32, %s210, %s198
        $region36: #{tpu_custom_call.1} parent=27 // pred_fallthru
          _
      $region28: #{tpu_custom_call.1} parent=5 // pred_fallthru
        _
      %p216 = scmp.le.s32.totalorder 2, %s14
      // Predicated region
      $region37: #{tpu_custom_call.1} parent=5 // pred_check
        %p217 = pneg %p216
      $region38: #{tpu_custom_call.1} parent=5 // pred_check_branch
        %219 = sbr.rel (%p217) target = $region40
      $region39: #{tpu_custom_call.1} parent=5 // pred_region
        %s220 = ssub.s32 %s14, 2
        // Predicated region
        $region41: #{tpu_custom_call.1} parent=39 // pred_check
          %p221 = pneg %p111
        $region42: #{tpu_custom_call.1} parent=39 // pred_check_branch
          %223 = sbr.rel (%p221) target = $region44
        $region43: #{tpu_custom_call.1} parent=39 // pred_region
          %s224 = sand.u32 %s96, 1
          %s225 = scalar_lea.sflag [#allocation4], %s224
          %s226 = sand.u32 %s96, 1
          %s227 = smul.addr %s226, 2
          %s228 = scalar_lea.vmem [#allocation5], %s227
          %229 = dma.done %s225, 32
        $region44: #{tpu_custom_call.1} parent=39 // pred_fallthru
          _
      $region40: #{tpu_custom_call.1} parent=5 // pred_fallthru
        _
    $region6: #{tpu_custom_call.1} parent=1 // loop_footer
      %s18 = sadd.s32 1, %s14
    $region7: #{tpu_custom_call.1} parent=1 // loop_footer_branch
      %13 = sbr.rel target = $region3
    $region8: #{tpu_custom_call.1} parent=1 // loop_exit
      _
    %230 = vsyncpa [#allocation3], 1
    %s231 = scalar_lea.sflag [#allocation3], 1
    %232 = vsyncpa %s231, 1
    %233 = vsyncpa [#allocation4], 1
    %s234 = scalar_lea.sflag [#allocation4], 1
    %235 = vsyncpa %s234, 1

</llo_original>
